<compile_context>
chip_gen: v6e
topology: v6e:2x2x1
jax: 0.10.0
libtpu: 0.0.40
codegen_flags: <defaults>
</compile_context>

<pallas_src>
import functools

import jax
import jax.numpy as jnp
from jax.experimental import pallas as pl
from jax.experimental.pallas import tpu as pltpu

HIDDEN = 256
BN_EPS = 1e-5
LANE = 128


# ---------------------------------------------------------------------------
# Shared math helpers (used by both the kernel body and the JAX reference).
# ---------------------------------------------------------------------------
def _elu(x):
    # exp argument clamped to <= 0: forward value identical, no inf generated
    # on the positive branch (safe under autodiff).
    return jnp.where(x > 0, x, jnp.exp(jnp.minimum(x, 0.0)) - 1.0)


def _bn_train(h, gamma, beta):
    """BatchNorm1d, training semantics: one-pass biased batch stats,
    scale/shift form (2 VPU ops/elem for the normalize)."""
    mean = jnp.mean(h, axis=0, keepdims=True)
    mean_sq = jnp.mean(h * h, axis=0, keepdims=True)
    var = mean_sq - mean * mean
    scale = gamma * jax.lax.rsqrt(var + BN_EPS)
    shift = beta - mean * scale
    return h * scale + shift


def _linear_small_k(x, w):
    """y = x @ w for tiny K: unrolled broadcast multiply-adds (VPU, no MXU)."""
    k_dim = w.shape[0]
    if k_dim > 16:  # static fallback for larger observation dims
        return jnp.dot(x, w, preferred_element_type=jnp.float32)
    y = x[:, 0:1] * w[0:1, :]
    for k in range(1, k_dim):
        y = y + x[:, k:k + 1] * w[k:k + 1, :]
    return y


# ---------------------------------------------------------------------------
# Kernel
# ---------------------------------------------------------------------------
def _make_kernel(n_obs, head_pad):
    def kernel(x_ref, sp_ref, w2_ref, wh_ref, out_ref):
        x = x_ref[...].astype(jnp.float32)          # [B, n_obs]
        sp = sp_ref[...]                            # [n_obs + 5, HIDDEN] f32
        w1 = sp[0:n_obs, :]
        g1 = sp[n_obs + 0:n_obs + 1, :]
        be1 = sp[n_obs + 1:n_obs + 2, :]
        g2 = sp[n_obs + 2:n_obs + 3, :]
        be2 = sp[n_obs + 3:n_obs + 4, :]
        bh = sp[n_obs + 4:n_obs + 5, 0:head_pad]    # fused head bias row

        # Layer 1: Linear(n_obs -> 256) on the VPU; bias omitted (BN cancels it).
        h1 = _linear_small_k(x, w1)
        h1 = _elu(_bn_train(h1, g1, be1))

        # Layer 2: 256x256 matmul, bf16 inputs / f32 accumulate on the MXU.
        # (bias again cancelled by training-mode BN.)
        h2 = jnp.dot(h1.astype(jnp.bfloat16), w2_ref[...],
                     preferred_element_type=jnp.float32)
        h2 = _elu(_bn_train(h2, g2, be2))

        # Fused actor+critic head: one lane-dense [B, 128] bf16 matmul, f32 acc,
        # f32 bias add, unmasked store.
        out = jnp.dot(h2.astype(jnp.bfloat16), wh_ref[...],
                      preferred_element_type=jnp.float32)
        out_ref[...] = (out + bh).astype(out_ref.dtype)

    return kernel


# ---------------------------------------------------------------------------
# Params / packing (packing runs ONCE, outside the per-call path)
# ---------------------------------------------------------------------------
def init_params(key, n_observation, n_action):
    """Mirrors MLP_A2C._init_weights.

    Linear: xavier_normal weight (bias 0.1 — l1/l2 biases are omitted here
    because training-mode BN cancels them exactly; the head biases are kept).
    BatchNorm1d: weight=1, bias=0.  Weights stored transposed to [in, out].
    """
    def xavier_normal(k, fan_in, fan_out):
        std = (2.0 / (fan_in + fan_out)) ** 0.5
        w = std * jax.random.normal(k, (fan_out, fan_in), dtype=jnp.float32)
        return w.T  # [in, out]

    k1, k2, k3, k4 = jax.random.split(key, 4)
    return dict(
        w1=xavier_normal(k1, n_observation, HIDDEN),
        w2=xavier_normal(k2, HIDDEN, HIDDEN),
        g1=jnp.ones((HIDDEN,), jnp.float32),
        be1=jnp.zeros((HIDDEN,), jnp.float32),
        g2=jnp.ones((HIDDEN,), jnp.float32),
        be2=jnp.zeros((HIDDEN,), jnp.float32),
        wa=xavier_normal(k3, HIDDEN, n_action),
        ba=jnp.full((n_action,), 0.1, jnp.float32),
        wc=xavier_normal(k4, HIDDEN, 1),
        bc=jnp.full((1,), 0.1, jnp.float32),
    )


def pack_params(params, n_action):
    """One-time packing of all per-feature vectors / heads into 3 arrays:
       sp  : [n_obs + 5, HIDDEN] f32  (W1 rows, gamma1, beta1, gamma2, beta2,
                                       fused head bias row)
       w2  : [HIDDEN, HIDDEN]    bf16
       wh  : [HIDDEN, head_pad]  bf16 (fused actor|critic weights, lane-padded)
    """
    head_w = n_action + 1
    head_pad = ((head_w + LANE - 1) // LANE) * LANE
    assert head_pad <= HIDDEN, "fused head wider than HIDDEN not supported"

    bh = jnp.concatenate([params["ba"], params["bc"]], axis=0)
    bh = jnp.pad(bh, (0, HIDDEN - head_w))  # pad bias row to slab width

    sp = jnp.concatenate(
        [params["w1"],
         jnp.stack([params["g1"], params["be1"],
                    params["g2"], params["be2"], bh], axis=0)],
        axis=0)  # [n_obs + 5, HIDDEN]

    w2_bf16 = params["w2"].astype(jnp.bfloat16)

    wh = jnp.concatenate([params["wa"], params["wc"]], axis=1)
    wh = jnp.pad(wh, ((0, 0), (0, head_pad - head_w))).astype(jnp.bfloat16)

    return dict(sp=sp, w2=w2_bf16, wh=wh)


# ---------------------------------------------------------------------------
# Forward (jitted; per-call work = one pallas_call + two slices)
# ---------------------------------------------------------------------------
@functools.partial(jax.jit, static_argnames=("n_action",))
def mlp_a2c_forward(x, packed, n_action):
    B, n_obs = x.shape
    sp, w2, wh = packed["sp"], packed["w2"], packed["wh"]
    head_pad = wh.shape[1]

    cost = pl.CostEstimate(
        flops=2 * B * HIDDEN * (n_obs + HIDDEN + head_pad),
        transcendentals=2 * B * HIDDEN,
        bytes_accessed=(x.size * 4 + sp.size * 4 + w2.size * 2
                        + wh.size * 2 + B * head_pad * 4),
    )

    vmem = pl.BlockSpec(memory_space=pltpu.MemorySpace.VMEM)
    out = pl.pallas_call(
        _make_kernel(n_obs, head_pad),
        out_shape=jax.ShapeDtypeStruct((B, head_pad), jnp.float32),
        in_specs=[vmem] * 4,
        out_specs=vmem,
        cost_estimate=cost,
    )(x, sp, w2, wh)

    logits = out[:, :n_action]
    v = out[:, n_action:n_action + 1]
    return logits, v


# ---------------------------------------------------------------------------
# Pure-JAX references
# ---------------------------------------------------------------------------
def reference_forward(x, params, bf16_matmul=True):
    """bf16_matmul=True mirrors the kernel's bf16-input/f32-accumulate layer-2
    and head matmuls; False is exact f32 (PyTorch) semantics."""
    h1 = _linear_small_k(x, params["w1"])
    h1 = _elu(_bn_train(h1, params["g1"][None, :], params["be1"][None, :]))
    wh = jnp.concatenate([params["wa"], params["wc"]], axis=1)
    bh = jnp.concatenate([params["ba"], params["bc"]], axis=0)[None, :]
    if bf16_matmul:
        h2 = jnp.dot(h1.astype(jnp.bfloat16), params["w2"].astype(jnp.bfloat16),
                     preferred_element_type=jnp.float32)
        h2 = _elu(_bn_train(h2, params["g2"][None, :], params["be2"][None, :]))
        out = jnp.dot(h2.astype(jnp.bfloat16), wh.astype(jnp.bfloat16),
                      preferred_element_type=jnp.float32) + bh
    else:
        h2 = jnp.dot(h1, params["w2"], precision=jax.lax.Precision.HIGHEST)
        h2 = _elu(_bn_train(h2, params["g2"][None, :], params["be2"][None, :]))
        out = jnp.dot(h2, wh, precision=jax.lax.Precision.HIGHEST) + bh
    n_action = params["wa"].shape[1]
    return out[:, :n_action], out[:, n_action:n_action + 1]


if __name__ == "__main__":
    n_observation = 3   # forward docstring: observation shape [batch_size, 3]
    n_action = 4
    batch = 8           # kept small for the test harness; throughput scales
                        # almost linearly with B (same kernel) up to MXU height

    key = jax.random.PRNGKey(0)
    k_param, k_x = jax.random.split(key)
    params = init_params(k_param, n_observation, n_action)
    packed = pack_params(params, n_action)          # one-time packing
    x = jax.random.normal(k_x, (batch, n_observation), dtype=jnp.float32)

    logits, v = mlp_a2c_forward(x, packed, n_action)
    jax.block_until_ready((logits, v))

    assert logits.shape == (batch, n_action)
    assert v.shape == (batch, 1)

    # Tight check against a reference using the same bf16-input matmuls.
    ref_logits, ref_v = reference_forward(x, params, bf16_matmul=True)
    assert jnp.allclose(logits, ref_logits, atol=2e-3, rtol=2e-3)
    assert jnp.allclose(v, ref_v, atol=2e-3, rtol=2e-3)

    # Loose sanity check against exact f32 (PyTorch-semantics) reference: the
    # only deviation source is bf16 matmul inputs with f32 accumulation.
    f32_logits, f32_v = reference_forward(x, params, bf16_matmul=False)
    assert jnp.allclose(logits, f32_logits, atol=5e-2, rtol=5e-2)
    assert jnp.allclose(v, f32_v, atol=5e-2, rtol=5e-2)

    print("KERNEL_OK")
</pallas_src>

<mosaic_0001>
module attributes {stable_mosaic.version = 11 : i64} {
  func.func @kernel(%arg0: memref<8x3xf32, #tpu.memory_space<vmem>>, %arg1: memref<8x256xf32, #tpu.memory_space<vmem>>, %arg2: memref<256x256xbf16, #tpu.memory_space<vmem>>, %arg3: memref<256x128xbf16, #tpu.memory_space<vmem>>, %arg4: memref<8x128xf32, #tpu.memory_space<vmem>>) attributes {dimension_semantics = [], scalar_prefetch = 0 : i64, scratch_operands = 0 : i64, tpu.core_type = #tpu.core_type<tc>} {
    %c0 = arith.constant 0 : index
    %c0_0 = arith.constant 0 : index
    %0 = vector.load %arg0[%c0, %c0_0] : memref<8x3xf32, #tpu.memory_space<vmem>>, vector<8x3xf32>
    %c0_1 = arith.constant 0 : index
    %c0_2 = arith.constant 0 : index
    %1 = vector.load %arg1[%c0_1, %c0_2] : memref<8x256xf32, #tpu.memory_space<vmem>>, vector<8x256xf32>
    %2 = vector.extract_strided_slice %1 {offsets = [0, 0], sizes = [3, 256], strides = [1, 1]} : vector<8x256xf32> to vector<3x256xf32>
    %3 = vector.extract_strided_slice %1 {offsets = [3, 0], sizes = [1, 256], strides = [1, 1]} : vector<8x256xf32> to vector<1x256xf32>
    %4 = vector.extract_strided_slice %1 {offsets = [4, 0], sizes = [1, 256], strides = [1, 1]} : vector<8x256xf32> to vector<1x256xf32>
    %5 = vector.extract_strided_slice %1 {offsets = [5, 0], sizes = [1, 256], strides = [1, 1]} : vector<8x256xf32> to vector<1x256xf32>
    %6 = vector.extract_strided_slice %1 {offsets = [6, 0], sizes = [1, 256], strides = [1, 1]} : vector<8x256xf32> to vector<1x256xf32>
    %7 = vector.extract_strided_slice %1 {offsets = [7, 0], sizes = [1, 128], strides = [1, 1]} : vector<8x256xf32> to vector<1x128xf32>
    %8 = vector.extract_strided_slice %0 {offsets = [0, 0], sizes = [8, 1], strides = [1, 1]} : vector<8x3xf32> to vector<8x1xf32>
    %9 = vector.extract_strided_slice %2 {offsets = [0, 0], sizes = [1, 256], strides = [1, 1]} : vector<3x256xf32> to vector<1x256xf32>
    %10 = vector.broadcast %8 : vector<8x1xf32> to vector<8x256xf32>
    %11 = vector.broadcast %9 : vector<1x256xf32> to vector<8x256xf32>
    %12 = arith.mulf %10, %11 : vector<8x256xf32>
    %13 = vector.extract_strided_slice %0 {offsets = [0, 1], sizes = [8, 1], strides = [1, 1]} : vector<8x3xf32> to vector<8x1xf32>
    %14 = vector.extract_strided_slice %2 {offsets = [1, 0], sizes = [1, 256], strides = [1, 1]} : vector<3x256xf32> to vector<1x256xf32>
    %15 = vector.broadcast %13 : vector<8x1xf32> to vector<8x256xf32>
    %16 = vector.broadcast %14 : vector<1x256xf32> to vector<8x256xf32>
    %17 = arith.mulf %15, %16 : vector<8x256xf32>
    %18 = arith.addf %12, %17 : vector<8x256xf32>
    %19 = vector.extract_strided_slice %0 {offsets = [0, 2], sizes = [8, 1], strides = [1, 1]} : vector<8x3xf32> to vector<8x1xf32>
    %20 = vector.extract_strided_slice %2 {offsets = [2, 0], sizes = [1, 256], strides = [1, 1]} : vector<3x256xf32> to vector<1x256xf32>
    %21 = vector.broadcast %19 : vector<8x1xf32> to vector<8x256xf32>
    %22 = vector.broadcast %20 : vector<1x256xf32> to vector<8x256xf32>
    %23 = arith.mulf %21, %22 : vector<8x256xf32>
    %24 = arith.addf %18, %23 : vector<8x256xf32>
    %cst = arith.constant dense<0.000000e+00> : vector<256xf32>
    %25 = vector.multi_reduction <add>, %24, %cst [0] : vector<8x256xf32> to vector<256xf32>
    %26 = vector.shape_cast %25 : vector<256xf32> to vector<1x256xf32>
    %cst_3 = arith.constant 8.000000e+00 : f32
    %27 = vector.broadcast %cst_3 : f32 to vector<1x256xf32>
    %28 = arith.divf %26, %27 : vector<1x256xf32>
    %29 = arith.mulf %24, %24 : vector<8x256xf32>
    %cst_4 = arith.constant dense<0.000000e+00> : vector<256xf32>
    %30 = vector.multi_reduction <add>, %29, %cst_4 [0] : vector<8x256xf32> to vector<256xf32>
    %31 = vector.shape_cast %30 : vector<256xf32> to vector<1x256xf32>
    %cst_5 = arith.constant 8.000000e+00 : f32
    %32 = vector.broadcast %cst_5 : f32 to vector<1x256xf32>
    %33 = arith.divf %31, %32 : vector<1x256xf32>
    %34 = arith.mulf %28, %28 : vector<1x256xf32>
    %35 = arith.subf %33, %34 : vector<1x256xf32>
    %cst_6 = arith.constant 9.99999974E-6 : f32
    %36 = vector.broadcast %cst_6 : f32 to vector<1x256xf32>
    %37 = arith.addf %35, %36 : vector<1x256xf32>
    %38 = math.rsqrt %37 : vector<1x256xf32>
    %39 = arith.mulf %3, %38 : vector<1x256xf32>
    %40 = arith.mulf %28, %39 : vector<1x256xf32>
    %41 = arith.subf %4, %40 : vector<1x256xf32>
    %42 = vector.broadcast %39 : vector<1x256xf32> to vector<8x256xf32>
    %43 = arith.mulf %24, %42 : vector<8x256xf32>
    %44 = vector.broadcast %41 : vector<1x256xf32> to vector<8x256xf32>
    %45 = arith.addf %43, %44 : vector<8x256xf32>
    %cst_7 = arith.constant 0.000000e+00 : f32
    %46 = vector.broadcast %cst_7 : f32 to vector<8x256xf32>
    %47 = arith.cmpf ogt, %45, %46 : vector<8x256xf32>
    %cst_8 = arith.constant 0.000000e+00 : f32
    %48 = vector.broadcast %cst_8 : f32 to vector<8x256xf32>
    %49 = arith.minimumf %45, %48 : vector<8x256xf32>
    %50 = math.exp %49 : vector<8x256xf32>
    %cst_9 = arith.constant 1.000000e+00 : f32
    %51 = vector.broadcast %cst_9 : f32 to vector<8x256xf32>
    %52 = arith.subf %50, %51 : vector<8x256xf32>
    %53 = arith.select %47, %45, %52 : vector<8x256xi1>, vector<8x256xf32>
    %54 = arith.truncf %53 : vector<8x256xf32> to vector<8x256xbf16>
    %c0_10 = arith.constant 0 : index
    %c0_11 = arith.constant 0 : index
    %55 = vector.load %arg2[%c0_10, %c0_11] : memref<256x256xbf16, #tpu.memory_space<vmem>>, vector<256x256xbf16>
    %cst_12 = arith.constant dense<0.000000e+00> : vector<8x256xf32>
    %56 = tpu.matmul %54, %55, %cst_12 {dimension_numbers = #tpu.dot_dimension_numbers<[1], [0], [0], [1], [0, 0, 1, 1], [], []>} : vector<8x256xbf16>, vector<256x256xbf16>, vector<8x256xf32> -> vector<8x256xf32>
    %cst_13 = arith.constant dense<0.000000e+00> : vector<256xf32>
    %57 = vector.multi_reduction <add>, %56, %cst_13 [0] : vector<8x256xf32> to vector<256xf32>
    %58 = vector.shape_cast %57 : vector<256xf32> to vector<1x256xf32>
    %cst_14 = arith.constant 8.000000e+00 : f32
    %59 = vector.broadcast %cst_14 : f32 to vector<1x256xf32>
    %60 = arith.divf %58, %59 : vector<1x256xf32>
    %61 = arith.mulf %56, %56 : vector<8x256xf32>
    %cst_15 = arith.constant dense<0.000000e+00> : vector<256xf32>
    %62 = vector.multi_reduction <add>, %61, %cst_15 [0] : vector<8x256xf32> to vector<256xf32>
    %63 = vector.shape_cast %62 : vector<256xf32> to vector<1x256xf32>
    %cst_16 = arith.constant 8.000000e+00 : f32
    %64 = vector.broadcast %cst_16 : f32 to vector<1x256xf32>
    %65 = arith.divf %63, %64 : vector<1x256xf32>
    %66 = arith.mulf %60, %60 : vector<1x256xf32>
    %67 = arith.subf %65, %66 : vector<1x256xf32>
    %cst_17 = arith.constant 9.99999974E-6 : f32
    %68 = vector.broadcast %cst_17 : f32 to vector<1x256xf32>
    %69 = arith.addf %67, %68 : vector<1x256xf32>
    %70 = math.rsqrt %69 : vector<1x256xf32>
    %71 = arith.mulf %5, %70 : vector<1x256xf32>
    %72 = arith.mulf %60, %71 : vector<1x256xf32>
    %73 = arith.subf %6, %72 : vector<1x256xf32>
    %74 = vector.broadcast %71 : vector<1x256xf32> to vector<8x256xf32>
    %75 = arith.mulf %56, %74 : vector<8x256xf32>
    %76 = vector.broadcast %73 : vector<1x256xf32> to vector<8x256xf32>
    %77 = arith.addf %75, %76 : vector<8x256xf32>
    %cst_18 = arith.constant 0.000000e+00 : f32
    %78 = vector.broadcast %cst_18 : f32 to vector<8x256xf32>
    %79 = arith.cmpf ogt, %77, %78 : vector<8x256xf32>
    %cst_19 = arith.constant 0.000000e+00 : f32
    %80 = vector.broadcast %cst_19 : f32 to vector<8x256xf32>
    %81 = arith.minimumf %77, %80 : vector<8x256xf32>
    %82 = math.exp %81 : vector<8x256xf32>
    %cst_20 = arith.constant 1.000000e+00 : f32
    %83 = vector.broadcast %cst_20 : f32 to vector<8x256xf32>
    %84 = arith.subf %82, %83 : vector<8x256xf32>
    %85 = arith.select %79, %77, %84 : vector<8x256xi1>, vector<8x256xf32>
    %86 = arith.truncf %85 : vector<8x256xf32> to vector<8x256xbf16>
    %c0_21 = arith.constant 0 : index
    %c0_22 = arith.constant 0 : index
    %87 = vector.load %arg3[%c0_21, %c0_22] : memref<256x128xbf16, #tpu.memory_space<vmem>>, vector<256x128xbf16>
    %cst_23 = arith.constant dense<0.000000e+00> : vector<8x128xf32>
    %88 = tpu.matmul %86, %87, %cst_23 {dimension_numbers = #tpu.dot_dimension_numbers<[1], [0], [0], [1], [0, 0, 1, 1], [], []>} : vector<8x256xbf16>, vector<256x128xbf16>, vector<8x128xf32> -> vector<8x128xf32>
    %89 = vector.broadcast %7 : vector<1x128xf32> to vector<8x128xf32>
    %90 = arith.addf %88, %89 : vector<8x128xf32>
    %c0_24 = arith.constant 0 : index
    %c0_25 = arith.constant 0 : index
    %91 = vector.load %arg4[%c0_24, %c0_25] : memref<8x128xf32, #tpu.memory_space<vmem>>, vector<8x128xf32>
    tpu.vector_store %arg4[%c0_24, %c0_25], %90 {strides = array<i32>} : memref<8x128xf32, #tpu.memory_space<vmem>>, vector<8x128xf32>,
    return
  }
}

</mosaic_0001>

<llo_original>
// kernel: mlp_a2c_forward.1
$region0: #{mlp_a2c_forward.1}
  #allocation0 [shape = 'u32[]', space=smem, size = 0x4, offset = 0x4, fixed_abs, tag = 'smem constant byte address 0x4 - core index']
  #allocation1 [shape = 'u32[144,128]{1,0:T(1,128)}', space=vmem, size = 0x12000, scoped, tag = 'internal scratch']
  %s0 = inlined_call_operand.vmem [shape: f32[8,3], index: 0, kind: input, shape index: {}]
  %s1 = inlined_call_operand.hbm [shape: f32[8,256], index: 1, kind: input, shape index: {}]
  %s2 = inlined_call_operand.hbm [shape: bf16[256,256], index: 2, kind: input, shape index: {}]
  %s3 = inlined_call_operand.hbm [shape: bf16[256,128], index: 3, kind: input, shape index: {}]
  %s4 = inlined_call_operand.vmem [shape: f32[8,128], index: 4, kind: output, shape index: {}]
  %s5 = sld [smem:[#allocation0]]
  $region38: #{mlp_a2c_forward.1} parent=0
    _
  %s7 = ssub.s32 1, %s5
  %s8 = scalar_select 0, %s7, %s5
  $region1: #{mlp_a2c_forward.1} parent=0
    #allocation2 [shape = 'u8[8192]{0}', space=vmem, size = 0x2000, scoped, tag = 'input window, operand 1, single buffered']
    #allocation3 [shape = 's32[1]{0}', space=sflag, size = 0x4, scoped, tag = 'scoped memory for mlp_a2c_forward.1']
    #allocation4 [shape = 'u8[131072]{0}', space=vmem, size = 0x20000, scoped, tag = 'input window, operand 2, single buffered']
    #allocation5 [shape = 's32[1]{0}', space=sflag, size = 0x4, scoped, tag = 'scoped memory for mlp_a2c_forward.1']
    #allocation6 [shape = 'u8[65536]{0}', space=vmem, size = 0x10000, scoped, tag = 'input window, operand 3, single buffered']
    %9 = vsyncpa [#allocation3], 0
    %10 = vsyncpa [#allocation5], 0
    // Predicated region
    $region2: #{mlp_a2c_forward.1} parent=1 // pred_check
      _
    $region3: #{mlp_a2c_forward.1} parent=1 // pred_check_branch
      %12 = sbr.rel (0) target = $region5
    $region4: #{mlp_a2c_forward.1} parent=1 // pred_region
      _
    $region5: #{mlp_a2c_forward.1} parent=1 // pred_fallthru
      _
    // Predicated region
    $region6: #{mlp_a2c_forward.1} parent=1 // pred_check
      _
    $region7: #{mlp_a2c_forward.1} parent=1 // pred_check_branch
      %14 = sbr.rel (0) target = $region9
    $region8: #{mlp_a2c_forward.1} parent=1 // pred_region
      %s16 = ssub.s32 256, 256
      %17 = vsyncadd [#allocation3], %s16
      %s19 = sshll.u32 [#allocation2], 4
      %s20 = int_to_ptr.vmem [resolvable:$true] %s19
      %22 = dma.hbm_to_vmem [thread:$0]  %s1, 256, %s20, [#allocation3]
    $region9: #{mlp_a2c_forward.1} parent=1 // pred_fallthru
      _
    // Predicated region
    $region10: #{mlp_a2c_forward.1} parent=1 // pred_check
      _
    $region11: #{mlp_a2c_forward.1} parent=1 // pred_check_branch
      %24 = sbr.rel (0) target = $region13
    $region12: #{mlp_a2c_forward.1} parent=1 // pred_region
      %s26 = ssub.s32 4096, 4096
      %27 = vsyncadd [#allocation5], %s26
      %s28 = sshll.u32 [#allocation4], 4
      %s29 = int_to_ptr.vmem [resolvable:$true] %s28
      %34 = dma.hbm_to_vmem [thread:$0]  %s2, 4096, %s29, [#allocation5], 128, 128, 8
    $region13: #{mlp_a2c_forward.1} parent=1 // pred_fallthru
      _
    // Predicated region
    $region14: #{mlp_a2c_forward.1} parent=1 // pred_check
      _
    $region15: #{mlp_a2c_forward.1} parent=1 // pred_check_branch
      %36 = sbr.rel (0) target = $region17
    $region16: #{mlp_a2c_forward.1} parent=1 // pred_region
      %s38 = ssub.s32 2048, 2048
      %39 = vsyncadd [#allocation5], %s38
      %s40 = sshll.u32 [#allocation6], 4
      %s41 = int_to_ptr.vmem [resolvable:$true] %s40
      %46 = dma.hbm_to_vmem [thread:$0]  %s3, 2048, %s41, [#allocation5], 64, 64, 4
    $region17: #{mlp_a2c_forward.1} parent=1 // pred_fallthru
      _
    // Predicated region
    $region18: #{mlp_a2c_forward.1} parent=1 // pred_check
      _
    $region19: #{mlp_a2c_forward.1} parent=1 // pred_check_branch
      %48 = sbr.rel (0) target = $region21
    $region20: #{mlp_a2c_forward.1} parent=1 // pred_region
      %49 = dma.done [#allocation3], 256
    $region21: #{mlp_a2c_forward.1} parent=1 // pred_fallthru
      _
    // Predicated region
    $region22: #{mlp_a2c_forward.1} parent=1 // pred_check
      _
    $region23: #{mlp_a2c_forward.1} parent=1 // pred_check_branch
      %51 = sbr.rel (0) target = $region25
    $region24: #{mlp_a2c_forward.1} parent=1 // pred_region
      %52 = dma.done [#allocation5], 4096
    $region25: #{mlp_a2c_forward.1} parent=1 // pred_fallthru
      _
    // Predicated region
    $region26: #{mlp_a2c_forward.1} parent=1 // pred_check
      _
    $region27: #{mlp_a2c_forward.1} parent=1 // pred_check_branch
      %54 = sbr.rel (0) target = $region29
    $region28: #{mlp_a2c_forward.1} parent=1 // pred_region
      %55 = dma.done [#allocation5], 2048
    $region29: #{mlp_a2c_forward.1} parent=1 // pred_fallthru
      _
    %v57 = vld [vmem:[%s0] sm:$0xff]
    %v58 = vld [vmem:[#allocation2] sm:$0xff]
    %v59 = vld [vmem:[#allocation2 + $0x8] sm:$0xff]
    %61 = vset.pattern.permute.xlu0 0
    %62 = vperm.xlu0 %61, %v57
    %v63 = vpop.permute.xlu0 %62
    %v65 = vlaneseq
    %v66 = vshrl.u32 %v65, 7
    %v67 = vsub.s32 0, %v66
    %v68 = vrot.slane %v58, %v67
    %v69 = vlaneseq
    %v70 = vshrl.u32 %v69, 7
    %v71 = vsub.s32 0, %v70
    %v72 = vrot.slane %v59, %v71
    %v73 = vmul.f32 %v63, %v68
    %v74 = vmul.f32 %v63, %v72
    %75 = vset.pattern.permute.xlu0 1
    %76 = vperm.xlu0 %75, %v57
    %v77 = vpop.permute.xlu0 %76
    %v79 = vlaneseq
    %v80 = vshrl.u32 %v79, 7
    %v81 = vsub.s32 1, %v80
    %v82 = vrot.slane %v58, %v81
    %v83 = vlaneseq
    %v84 = vshrl.u32 %v83, 7
    %v85 = vsub.s32 1, %v84
    %v86 = vrot.slane %v59, %v85
    %v87 = vmul.f32 %v77, %v82
    %v88 = vmul.f32 %v77, %v86
    %v89 = vadd.f32 %v73, %v87
    %v90 = vadd.f32 %v74, %v88
    %91 = vset.pattern.permute.xlu0 2
    %92 = vperm.xlu0 %91, %v57
    %v93 = vpop.permute.xlu0 %92
    %v95 = vlaneseq
    %v96 = vshrl.u32 %v95, 7
    %v97 = vsub.s32 2, %v96
    %v98 = vrot.slane %v58, %v97
    %v99 = vlaneseq
    %v100 = vshrl.u32 %v99, 7
    %v101 = vsub.s32 2, %v100
    %v102 = vrot.slane %v59, %v101
    %v103 = vmul.f32 %v93, %v98
    %v104 = vmul.f32 %v93, %v102
    %v105 = vadd.f32 %v89, %v103
    %v106 = vadd.f32 %v90, %v104
    %v107 = vrot.slane %v105, 4
    %v108 = vadd.f32 %v105, %v107
    %v109 = vrot.slane %v108, 2
    %v110 = vadd.f32 %v108, %v109
    %v111 = vrot.slane %v110, 1
    %v112 = vadd.f32 %v110, %v111
    %v113 = vrot.slane %v106, 4
    %v114 = vadd.f32 %v106, %v113
    %v115 = vrot.slane %v114, 2
    %v116 = vadd.f32 %v114, %v115
    %v117 = vrot.slane %v116, 1
    %v118 = vadd.f32 %v116, %v117
    %v119 = vrcp.pop 8.0
    %v120 = vmul.f32 %v112, %v119
    %v121 = vmul.f32 %v118, %v119
    %v122 = vmul.f32 %v105, %v105
    %v123 = vmul.f32 %v106, %v106
    %v124 = vrot.slane %v122, 4
    %v125 = vadd.f32 %v122, %v124
    %v126 = vrot.slane %v125, 2
    %v127 = vadd.f32 %v125, %v126
    %v128 = vrot.slane %v127, 1
    %v129 = vadd.f32 %v127, %v128
    %v130 = vrot.slane %v123, 4
    %v131 = vadd.f32 %v123, %v130
    %v132 = vrot.slane %v131, 2
    %v133 = vadd.f32 %v131, %v132
    %v134 = vrot.slane %v133, 1
    %v135 = vadd.f32 %v133, %v134
    %v136 = vmul.f32 %v129, %v119
    %v137 = vmul.f32 %v135, %v119
    %v138 = vmul.f32 %v120, %v120
    %v139 = vmul.f32 %v121, %v121
    %v140 = vsub.f32 %v136, %v138
    %v141 = vsub.f32 %v137, %v139
    %v142 = vadd.f32 %v140, 1e-05
    %v143 = vadd.f32 %v141, 1e-05
    %v144 = vrsqrt.pop %v142
    %v145 = vrsqrt.pop %v143
    %v146 = vmul.f32 %v58, %v144
    %v147 = vmul.f32 %v59, %v145
    %v148 = vmul.f32 %v120, %v146
    %v149 = vmul.f32 %v121, %v147
    %v152 = vrot.slane %v148, 7
    %v153 = vrot.slane %v149, 7
    %v156 = vsub.f32 %v58, %v152
    %v157 = vsub.f32 %v59, %v153
    %v158 = vlaneseq
    %v159 = vshrl.u32 %v158, 7
    %v160 = vsub.s32 3, %v159
    %v161 = vrot.slane %v146, %v160
    %v162 = vlaneseq
    %v163 = vshrl.u32 %v162, 7
    %v164 = vsub.s32 3, %v163
    %v165 = vrot.slane %v147, %v164
    %v166 = vmul.f32 %v105, %v161
    %v167 = vmul.f32 %v106, %v165
    %v168 = vlaneseq
    %v169 = vshrl.u32 %v168, 7
    %v170 = vsub.s32 4, %v169
    %v171 = vrot.slane %v156, %v170
    %v172 = vlaneseq
    %v173 = vshrl.u32 %v172, 7
    %v174 = vsub.s32 4, %v173
    %v175 = vrot.slane %v157, %v174
    %v176 = vadd.f32 %v166, %v171
    %v177 = vadd.f32 %v167, %v175
    %vm178 = vcmp.gt.f32.partialorder %v176, 0.0
    %vm179 = vcmp.gt.f32.partialorder %v177, 0.0
    %v180 = vmin.f32 %v176, 0.0
    %v181 = vmin.f32 %v177, 0.0
    %v182 = vmul.f32 %v180, 1.442695
    %v183 = vpow.pop %v182
    %v184 = vmul.f32 %v181, 1.442695
    %v185 = vpow.pop %v184
    %v186 = vsub.f32 %v183, 1.0
    %v187 = vsub.f32 %v185, 1.0
    %v188 = vsel %vm178, %v176, %v186
    %v189 = vsel %vm179, %v177, %v187
    %v190 = vpack.c.bf16 %v188, %v188
    %v191 = vpack.c.bf16 %v189, %v189
    %v192 = vld [vmem:[#allocation4] sm:$0xff]
    %v193 = vld [vmem:[#allocation4 + $0x8] sm:$0xff]
    %v194 = vld [vmem:[#allocation4 + $0x10] sm:$0xff]
    %v195 = vld [vmem:[#allocation4 + $0x18] sm:$0xff]
    %v196 = vld [vmem:[#allocation4 + $0x20] sm:$0xff]
    %v197 = vld [vmem:[#allocation4 + $0x28] sm:$0xff]
    %v198 = vld [vmem:[#allocation4 + $0x30] sm:$0xff]
    %v199 = vld [vmem:[#allocation4 + $0x38] sm:$0xff]
    %v200 = vld [vmem:[#allocation4 + $0x40] sm:$0xff]
    %v201 = vld [vmem:[#allocation4 + $0x48] sm:$0xff]
    %v202 = vld [vmem:[#allocation4 + $0x50] sm:$0xff]
    %v203 = vld [vmem:[#allocation4 + $0x58] sm:$0xff]
    %v204 = vld [vmem:[#allocation4 + $0x60] sm:$0xff]
    %v205 = vld [vmem:[#allocation4 + $0x68] sm:$0xff]
    %v206 = vld [vmem:[#allocation4 + $0x70] sm:$0xff]
    %v207 = vld [vmem:[#allocation4 + $0x78] sm:$0xff]
    %v208 = vld [vmem:[#allocation4 + $0x80] sm:$0xff]
    %v209 = vld [vmem:[#allocation4 + $0x88] sm:$0xff]
    %v210 = vld [vmem:[#allocation4 + $0x90] sm:$0xff]
    %v211 = vld [vmem:[#allocation4 + $0x98] sm:$0xff]
    %v212 = vld [vmem:[#allocation4 + $0xa0] sm:$0xff]
    %v213 = vld [vmem:[#allocation4 + $0xa8] sm:$0xff]
    %v214 = vld [vmem:[#allocation4 + $0xb0] sm:$0xff]
    %v215 = vld [vmem:[#allocation4 + $0xb8] sm:$0xff]
    %v216 = vld [vmem:[#allocation4 + $0xc0] sm:$0xff]
    %v217 = vld [vmem:[#allocation4 + $0xc8] sm:$0xff]
    %v218 = vld [vmem:[#allocation4 + $0xd0] sm:$0xff]
    %v219 = vld [vmem:[#allocation4 + $0xd8] sm:$0xff]
    %v220 = vld [vmem:[#allocation4 + $0xe0] sm:$0xff]
    %v221 = vld [vmem:[#allocation4 + $0xe8] sm:$0xff]
    %v222 = vld [vmem:[#allocation4 + $0xf0] sm:$0xff]
    %v223 = vld [vmem:[#allocation4 + $0xf8] sm:$0xff]
    %v256 = vunpack.c.l.b16 %v192
    %v257 = vunpack.c.h.b16 %v192
    %v258 = vunpack.c.l.b16 %v193
    %v259 = vunpack.c.h.b16 %v193
    %v260 = vunpack.c.l.b16 %v194
    %v261 = vunpack.c.h.b16 %v194
    %v262 = vunpack.c.l.b16 %v195
    %v263 = vunpack.c.h.b16 %v195
    %v264 = vunpack.c.l.b16 %v196
    %v265 = vunpack.c.h.b16 %v196
    %v266 = vunpack.c.l.b16 %v197
    %v267 = vunpack.c.h.b16 %v197
    %v268 = vunpack.c.l.b16 %v198
    %v269 = vunpack.c.h.b16 %v198
    %v270 = vunpack.c.l.b16 %v199
    %v271 = vunpack.c.h.b16 %v199
    %v272 = vunpack.c.l.b16 %v200
    %v273 = vunpack.c.h.b16 %v200
    %v274 = vunpack.c.l.b16 %v201
    %v275 = vunpack.c.h.b16 %v201
    %v276 = vunpack.c.l.b16 %v202
    %v277 = vunpack.c.h.b16 %v202
    %v278 = vunpack.c.l.b16 %v203
    %v279 = vunpack.c.h.b16 %v203
    %v280 = vunpack.c.l.b16 %v204
    %v281 = vunpack.c.h.b16 %v204
    %v282 = vunpack.c.l.b16 %v205
    %v283 = vunpack.c.h.b16 %v205
    %v284 = vunpack.c.l.b16 %v206
    %v285 = vunpack.c.h.b16 %v206
    %v286 = vunpack.c.l.b16 %v207
    %v287 = vunpack.c.h.b16 %v207
    %v288 = vunpack.c.l.b16 %v208
    %v289 = vunpack.c.h.b16 %v208
    %v290 = vunpack.c.l.b16 %v209
    %v291 = vunpack.c.h.b16 %v209
    %v292 = vunpack.c.l.b16 %v210
    %v293 = vunpack.c.h.b16 %v210
    %v294 = vunpack.c.l.b16 %v211
    %v295 = vunpack.c.h.b16 %v211
    %v296 = vunpack.c.l.b16 %v212
    %v297 = vunpack.c.h.b16 %v212
    %v298 = vunpack.c.l.b16 %v213
    %v299 = vunpack.c.h.b16 %v213
    %v300 = vunpack.c.l.b16 %v214
    %v301 = vunpack.c.h.b16 %v214
    %v302 = vunpack.c.l.b16 %v215
    %v303 = vunpack.c.h.b16 %v215
    %v304 = vunpack.c.l.b16 %v216
    %v305 = vunpack.c.h.b16 %v216
    %v306 = vunpack.c.l.b16 %v217
    %v307 = vunpack.c.h.b16 %v217
    %v308 = vunpack.c.l.b16 %v218
    %v309 = vunpack.c.h.b16 %v218
    %v310 = vunpack.c.l.b16 %v219
    %v311 = vunpack.c.h.b16 %v219
    %v312 = vunpack.c.l.b16 %v220
    %v313 = vunpack.c.h.b16 %v220
    %v314 = vunpack.c.l.b16 %v221
    %v315 = vunpack.c.h.b16 %v221
    %v316 = vunpack.c.l.b16 %v222
    %v317 = vunpack.c.h.b16 %v222
    %v318 = vunpack.c.l.b16 %v223
    %v319 = vunpack.c.h.b16 %v223
    %v320 = vpack.c.b16 %v258, %v256
    %v321 = vpack.c.b16 %v259, %v257
    %v322 = vpack.c.b16 %v262, %v260
    %v323 = vpack.c.b16 %v263, %v261
    %v324 = vpack.c.b16 %v266, %v264
    %v325 = vpack.c.b16 %v267, %v265
    %v326 = vpack.c.b16 %v270, %v268
    %v327 = vpack.c.b16 %v271, %v269
    %v328 = vpack.c.b16 %v274, %v272
    %v329 = vpack.c.b16 %v275, %v273
    %v330 = vpack.c.b16 %v278, %v276
    %v331 = vpack.c.b16 %v279, %v277
    %v332 = vpack.c.b16 %v282, %v280
    %v333 = vpack.c.b16 %v283, %v281
    %v334 = vpack.c.b16 %v286, %v284
    %v335 = vpack.c.b16 %v287, %v285
    %v336 = vpack.c.b16 %v290, %v288
    %v337 = vpack.c.b16 %v291, %v289
    %v338 = vpack.c.b16 %v294, %v292
    %v339 = vpack.c.b16 %v295, %v293
    %v340 = vpack.c.b16 %v298, %v296
    %v341 = vpack.c.b16 %v299, %v297
    %v342 = vpack.c.b16 %v302, %v300
    %v343 = vpack.c.b16 %v303, %v301
    %v344 = vpack.c.b16 %v306, %v304
    %v345 = vpack.c.b16 %v307, %v305
    %v346 = vpack.c.b16 %v310, %v308
    %v347 = vpack.c.b16 %v311, %v309
    %v348 = vpack.c.b16 %v314, %v312
    %v349 = vpack.c.b16 %v315, %v313
    %v350 = vpack.c.b16 %v318, %v316
    %v351 = vpack.c.b16 %v319, %v317
    %384 = vmatprep.subr.bf16.mxu0 %v335
    %385 = vmatpush1.bf16.msra.mxu0 %v334
    %386 = vmatprep.subr.bf16.mxu0 %v333
    %387 = vmatpush1.bf16.msra.mxu0 %v332
    %388 = vmatprep.subr.bf16.mxu0 %v331
    %389 = vmatpush1.bf16.msra.mxu0 %v330
    %390 = vmatprep.subr.bf16.mxu0 %v329
    %391 = vmatpush1.bf16.msra.mxu0 %v328
    %392 = vmatprep.subr.bf16.mxu0 %v327
    %393 = vmatpush1.bf16.msra.mxu0 %v326
    %394 = vmatprep.subr.bf16.mxu0 %v325
    %395 = vmatpush1.bf16.msra.mxu0 %v324
    %396 = vmatprep.subr.bf16.mxu0 %v323
    %397 = vmatpush1.bf16.msra.mxu0 %v322
    %398 = vmatprep.subr.bf16.mxu0 %v321
    %399 = vmatpush1.bf16.msra.mxu0 %v320
    %400 = vmatprep.subr.bf16.mxu0 %v351
    %401 = vmatpush2.bf16.msra.mxu0 %v350
    %402 = vmatprep.subr.bf16.mxu0 %v349
    %403 = vmatpush2.bf16.msra.mxu0 %v348
    %404 = vmatprep.subr.bf16.mxu0 %v347
    %405 = vmatpush2.bf16.msra.mxu0 %v346
    %406 = vmatprep.subr.bf16.mxu0 %v345
    %407 = vmatpush2.bf16.msra.mxu0 %v344
    %408 = vmatprep.subr.bf16.mxu0 %v343
    %409 = vmatpush2.bf16.msra.mxu0 %v342
    %410 = vmatprep.subr.bf16.mxu0 %v341
    %411 = vmatpush2.bf16.msra.mxu0 %v340
    %412 = vmatprep.subr.bf16.mxu0 %v339
    %413 = vmatpush2.bf16.msra.mxu0 %v338
    %414 = vmatprep.subr.bf16.mxu0 %v337
    %415 = vmatpush2.bf16.msra.mxu0 %v336
    %416 = vmatprep.mubr.bf16.mxu0 %v191
    %417 = vmatmul.mubr.bf16.gmra.mxu0 %v190
    %v418 = vpop.f32.mrf.mxu0
    %v419 = vadd.f32 0.0, %v418
    %v420 = vpop.f32.mrf.mxu0
    %v421 = vadd.f32 0.0, %v420
    %v422 = vpop.f32.mrf.mxu0
    %v423 = vpop.f32.mrf.mxu0
    %424 = vdwg.mxu0
    %v425 = vrot.slane %v419, 4
    %v426 = vadd.f32 %v419, %v425
    %v427 = vrot.slane %v426, 2
    %v428 = vadd.f32 %v426, %v427
    %v429 = vrot.slane %v428, 1
    %v430 = vadd.f32 %v428, %v429
    %v431 = vrot.slane %v421, 4
    %v432 = vadd.f32 %v421, %v431
    %v433 = vrot.slane %v432, 2
    %v434 = vadd.f32 %v432, %v433
    %v435 = vrot.slane %v434, 1
    %v436 = vadd.f32 %v434, %v435
    %v437 = vmul.f32 %v430, %v119
    %v438 = vmul.f32 %v436, %v119
    %v439 = vmul.f32 %v419, %v419
    %v440 = vmul.f32 %v421, %v421
    %v441 = vrot.slane %v439, 4
    %v442 = vadd.f32 %v439, %v441
    %v443 = vrot.slane %v442, 2
    %v444 = vadd.f32 %v442, %v443
    %v445 = vrot.slane %v444, 1
    %v446 = vadd.f32 %v444, %v445
    %v447 = vrot.slane %v440, 4
    %v448 = vadd.f32 %v440, %v447
    %v449 = vrot.slane %v448, 2
    %v450 = vadd.f32 %v448, %v449
    %v451 = vrot.slane %v450, 1
    %v452 = vadd.f32 %v450, %v451
    %v453 = vmul.f32 %v446, %v119
    %v454 = vmul.f32 %v452, %v119
    %v455 = vmul.f32 %v437, %v437
    %v456 = vmul.f32 %v438, %v438
    %v457 = vsub.f32 %v453, %v455
    %v458 = vsub.f32 %v454, %v456
    %v459 = vadd.f32 %v457, 1e-05
    %v460 = vadd.f32 %v458, 1e-05
    %v461 = vrsqrt.pop %v459
    %v462 = vrsqrt.pop %v460
    %v463 = vmul.f32 %v58, %v461
    %v464 = vmul.f32 %v59, %v462
    %v465 = vmul.f32 %v437, %v463
    %v466 = vmul.f32 %v438, %v464
    %v469 = vrot.slane %v465, 7
    %v470 = vrot.slane %v466, 7
    %v473 = vsub.f32 %v58, %v469
    %v474 = vsub.f32 %v59, %v470
    %v475 = vlaneseq
    %v476 = vshrl.u32 %v475, 7
    %v477 = vsub.s32 5, %v476
    %v478 = vrot.slane %v463, %v477
    %v479 = vlaneseq
    %v480 = vshrl.u32 %v479, 7
    %v481 = vsub.s32 5, %v480
    %v482 = vrot.slane %v464, %v481
    %v483 = vmul.f32 %v419, %v478
    %v484 = vmul.f32 %v421, %v482
    %v485 = vlaneseq
    %v486 = vshrl.u32 %v485, 7
    %v487 = vsub.s32 6, %v486
    %v488 = vrot.slane %v473, %v487
    %v489 = vlaneseq
    %v490 = vshrl.u32 %v489, 7
    %v491 = vsub.s32 6, %v490
    %v492 = vrot.slane %v474, %v491
    %v493 = vadd.f32 %v483, %v488
    %v494 = vadd.f32 %v484, %v492
    %vm495 = vcmp.gt.f32.partialorder %v493, 0.0
    %vm496 = vcmp.gt.f32.partialorder %v494, 0.0
    %v497 = vmin.f32 %v493, 0.0
    %v498 = vmin.f32 %v494, 0.0
    %v499 = vmul.f32 %v497, 1.442695
    %v500 = vpow.pop %v499
    %v501 = vmul.f32 %v498, 1.442695
    %v502 = vpow.pop %v501
    %v503 = vsub.f32 %v500, 1.0
    %v504 = vsub.f32 %v502, 1.0
    %v505 = vsel %vm495, %v493, %v503
    %v506 = vsel %vm496, %v494, %v504
    %v507 = vpack.c.bf16 %v505, %v505
    %v508 = vpack.c.bf16 %v506, %v506
    %v509 = vld [vmem:[#allocation6] sm:$0xf]
    %v510 = vld [vmem:[#allocation6 + $0x4] sm:$0xf]
    %v511 = vld [vmem:[#allocation6 + $0x8] sm:$0xf]
    %v512 = vld [vmem:[#allocation6 + $0xc] sm:$0xf]
    %v513 = vld [vmem:[#allocation6 + $0x10] sm:$0xf]
    %v514 = vld [vmem:[#allocation6 + $0x14] sm:$0xf]
    %v515 = vld [vmem:[#allocation6 + $0x18] sm:$0xf]
    %v516 = vld [vmem:[#allocation6 + $0x1c] sm:$0xf]
    %v517 = vld [vmem:[#allocation6 + $0x20] sm:$0xf]
    %v518 = vld [vmem:[#allocation6 + $0x24] sm:$0xf]
    %v519 = vld [vmem:[#allocation6 + $0x28] sm:$0xf]
    %v520 = vld [vmem:[#allocation6 + $0x2c] sm:$0xf]
    %v521 = vld [vmem:[#allocation6 + $0x30] sm:$0xf]
    %v522 = vld [vmem:[#allocation6 + $0x34] sm:$0xf]
    %v523 = vld [vmem:[#allocation6 + $0x38] sm:$0xf]
    %v524 = vld [vmem:[#allocation6 + $0x3c] sm:$0xf]
    %v525 = vld [vmem:[#allocation6 + $0x40] sm:$0xf]
    %v526 = vld [vmem:[#allocation6 + $0x44] sm:$0xf]
    %v527 = vld [vmem:[#allocation6 + $0x48] sm:$0xf]
    %v528 = vld [vmem:[#allocation6 + $0x4c] sm:$0xf]
    %v529 = vld [vmem:[#allocation6 + $0x50] sm:$0xf]
    %v530 = vld [vmem:[#allocation6 + $0x54] sm:$0xf]
    %v531 = vld [vmem:[#allocation6 + $0x58] sm:$0xf]
    %v532 = vld [vmem:[#allocation6 + $0x5c] sm:$0xf]
    %v533 = vld [vmem:[#allocation6 + $0x60] sm:$0xf]
    %v534 = vld [vmem:[#allocation6 + $0x64] sm:$0xf]
    %v535 = vld [vmem:[#allocation6 + $0x68] sm:$0xf]
    %v536 = vld [vmem:[#allocation6 + $0x6c] sm:$0xf]
    %v537 = vld [vmem:[#allocation6 + $0x70] sm:$0xf]
    %v538 = vld [vmem:[#allocation6 + $0x74] sm:$0xf]
    %v539 = vld [vmem:[#allocation6 + $0x78] sm:$0xf]
    %v540 = vld [vmem:[#allocation6 + $0x7c] sm:$0xf]
    %v541 = vlaneseq
    %v542 = vshrl.u32 %v541, 7
    %v543 = vsub.s32 7, %v542
    %v544 = vrot.slane %v58, %v543
    %v577 = vunpack.c.l.b16 %v509
    %v578 = vunpack.c.l.b16 %v510
    %v579 = vunpack.c.l.b16 %v511
    %v580 = vunpack.c.l.b16 %v512
    %v581 = vunpack.c.l.b16 %v513
    %v582 = vunpack.c.l.b16 %v514
    %v583 = vunpack.c.l.b16 %v515
    %v584 = vunpack.c.l.b16 %v516
    %v585 = vunpack.c.l.b16 %v517
    %v586 = vunpack.c.l.b16 %v518
    %v587 = vunpack.c.l.b16 %v519
    %v588 = vunpack.c.l.b16 %v520
    %v589 = vunpack.c.l.b16 %v521
    %v590 = vunpack.c.l.b16 %v522
    %v591 = vunpack.c.l.b16 %v523
    %v592 = vunpack.c.l.b16 %v524
    %v593 = vunpack.c.l.b16 %v525
    %v594 = vunpack.c.l.b16 %v526
    %v595 = vunpack.c.l.b16 %v527
    %v596 = vunpack.c.l.b16 %v528
    %v597 = vunpack.c.l.b16 %v529
    %v598 = vunpack.c.l.b16 %v530
    %v599 = vunpack.c.l.b16 %v531
    %v600 = vunpack.c.l.b16 %v532
    %v601 = vunpack.c.l.b16 %v533
    %v602 = vunpack.c.l.b16 %v534
    %v603 = vunpack.c.l.b16 %v535
    %v604 = vunpack.c.l.b16 %v536
    %v605 = vunpack.c.l.b16 %v537
    %v606 = vunpack.c.l.b16 %v538
    %v607 = vunpack.c.l.b16 %v539
    %v608 = vunpack.c.l.b16 %v540
    %v609 = vpack.c.b16 %v578, %v577
    %v610 = vpack.c.b16 %v580, %v579
    %v611 = vpack.c.b16 %v582, %v581
    %v612 = vpack.c.b16 %v584, %v583
    %v613 = vpack.c.b16 %v586, %v585
    %v614 = vpack.c.b16 %v588, %v587
    %v615 = vpack.c.b16 %v590, %v589
    %v616 = vpack.c.b16 %v592, %v591
    %v617 = vpack.c.b16 %v594, %v593
    %v618 = vpack.c.b16 %v596, %v595
    %v619 = vpack.c.b16 %v598, %v597
    %v620 = vpack.c.b16 %v600, %v599
    %v621 = vpack.c.b16 %v602, %v601
    %v622 = vpack.c.b16 %v604, %v603
    %v623 = vpack.c.b16 %v606, %v605
    %v624 = vpack.c.b16 %v608, %v607
    %641 = vmatprep.subr.bf16.mxu0 0
    %642 = vmatpush1.bf16.msra.mxu0 %v616
    %643 = vmatprep.subr.bf16.mxu0 0
    %644 = vmatpush1.bf16.msra.mxu0 %v615
    %645 = vmatprep.subr.bf16.mxu0 0
    %646 = vmatpush1.bf16.msra.mxu0 %v614
    %647 = vmatprep.subr.bf16.mxu0 0
    %648 = vmatpush1.bf16.msra.mxu0 %v613
    %649 = vmatprep.subr.bf16.mxu0 0
    %650 = vmatpush1.bf16.msra.mxu0 %v612
    %651 = vmatprep.subr.bf16.mxu0 0
    %652 = vmatpush1.bf16.msra.mxu0 %v611
    %653 = vmatprep.subr.bf16.mxu0 0
    %654 = vmatpush1.bf16.msra.mxu0 %v610
    %655 = vmatprep.subr.bf16.mxu0 0
    %656 = vmatpush1.bf16.msra.mxu0 %v609
    %657 = vmatprep.subr.bf16.mxu0 0
    %658 = vmatpush2.bf16.msra.mxu0 %v624
    %659 = vmatprep.subr.bf16.mxu0 0
    %660 = vmatpush2.bf16.msra.mxu0 %v623
    %661 = vmatprep.subr.bf16.mxu0 0
    %662 = vmatpush2.bf16.msra.mxu0 %v622
    %663 = vmatprep.subr.bf16.mxu0 0
    %664 = vmatpush2.bf16.msra.mxu0 %v621
    %665 = vmatprep.subr.bf16.mxu0 0
    %666 = vmatpush2.bf16.msra.mxu0 %v620
    %667 = vmatprep.subr.bf16.mxu0 0
    %668 = vmatpush2.bf16.msra.mxu0 %v619
    %669 = vmatprep.subr.bf16.mxu0 0
    %670 = vmatpush2.bf16.msra.mxu0 %v618
    %671 = vmatprep.subr.bf16.mxu0 0
    %672 = vmatpush2.bf16.msra.mxu0 %v617
    %673 = vmatprep.mubr.bf16.mxu0 %v508
    %674 = vmatmul.mubr.bf16.gmra.mxu0 %v507
    %v675 = vpop.f32.mrf.mxu0
    %v676 = vadd.f32 %v544, %v675
    %v677 = vpop.f32.mrf.mxu0
    %v678 = vpop.f32.mrf.mxu0
    %v679 = vpop.f32.mrf.mxu0
    %680 = vdwg.mxu0
    %681 = vst [vmem:[%s4] sm:$0xff] %v676
    // Predicated region
    $region30: #{mlp_a2c_forward.1} parent=1 // pred_check
      _
    $region31: #{mlp_a2c_forward.1} parent=1 // pred_check_branch
      %683 = sbr.rel (0) target = $region33
    $region32: #{mlp_a2c_forward.1} parent=1 // pred_region
      _
    $region33: #{mlp_a2c_forward.1} parent=1 // pred_fallthru
      _
    // Predicated region
    $region34: #{mlp_a2c_forward.1} parent=1 // pred_check
      _
    $region35: #{mlp_a2c_forward.1} parent=1 // pred_check_branch
      %685 = sbr.rel (0) target = $region37
    $region36: #{mlp_a2c_forward.1} parent=1 // pred_region
      _
    $region37: #{mlp_a2c_forward.1} parent=1 // pred_fallthru
      _
    %686 = vsyncpa [#allocation3], 1
    %687 = vsyncpa [#allocation5], 1

</llo_original>
